<compile_context>
chip_gen: v5e
topology: v5e:2x2
jax: 0.10.0
libtpu: 0.0.40
codegen_flags: <defaults>
</compile_context>

<pallas_src>
import jax
import jax.numpy as jnp
import numpy as np
from jax.experimental import pallas as pl
from jax.experimental.pallas import tpu as pltpu

LOG_EPSILON = 1e-7                    # epsilon inside the log distance
EPS_SQ = LOG_EPSILON * LOG_EPSILON    # eps^2 (applied to the power spectrum)
SCALES = [64, 32]                     # multiscale STFT window sizes (n_fft)
OVERLAP = 4                           # hop = n_fft // OVERLAP
LANE = 128                            # TPU lane width
MAX_SUPER_TILE = 1024                 # super-rows (= 4 frames each) per grid step
MIN_SUPER_TILE = 16                   # bf16 sublane packing -> multiples of 16
VMEM_LIMIT_BYTES = 40 * 1024 * 1024   # above the 16/32 MiB scoped defaults, < 64 MiB v7x


def _round_up(x: int, m: int) -> int:
    return ((x + m - 1) // m) * m


def _num_tensorcore_splits() -> int:
    """2 on megacore chips (v7x / v4 / v5p), 1 on single-TC parts (v5e / v6e)."""
    try:
        kind = jax.devices()[0].device_kind.lower()
    except Exception:
        return 1
    if "lite" in kind or "v5e" in kind or "v6e" in kind:
        return 1
    return 2


# ---------------------------------------------------------------------------
# Parameter setup (deterministic, in-script).
# ---------------------------------------------------------------------------
def _dft_mats(n_fft: int):
    """Periodic-hann-windowed real-DFT matrices (numpy f32)."""
    n = np.arange(n_fft)
    k = np.arange(n_fft // 2 + 1)
    win = 0.5 * (1.0 - np.cos(2.0 * np.pi * n / n_fft))        # periodic hann
    ang = 2.0 * np.pi * np.outer(n, k) / n_fft
    wr = (win[:, None] * np.cos(ang)).astype(np.float32)
    wi = (-win[:, None] * np.sin(ang)).astype(np.float32)
    return wr, wi


def _make_folded_basis(n_fft: int):
    """Hop-folded basis W of shape (2*n_fft, 8*block), bf16.

    A super-row of 2*n_fft samples (stride n_fft) times W yields, for each of
    the OVERLAP frame offsets j, Re bins in lanes [j*block, j*block+n_bins)
    and Im bins in lanes [half + j*block, ...), half = OVERLAP*block (multiple
    of 128).  Padded lanes are all-zero columns -> contribute exactly 0.
    """
    hop = n_fft // OVERLAP
    n_bins = n_fft // 2 + 1
    block = _round_up(n_bins, 32)            # 4*block is a multiple of 128
    half = OVERLAP * block
    wr, wi = _dft_mats(n_fft)
    w = np.zeros((2 * n_fft, 2 * half), np.float32)
    for j in range(OVERLAP):
        r0 = j * hop
        w[r0:r0 + n_fft, j * block: j * block + n_bins] = wr
        w[r0:r0 + n_fft, half + j * block: half + j * block + n_bins] = wi
    return jnp.asarray(w, dtype=jnp.bfloat16), n_bins, half


def _super_frames(sig2d: jnp.ndarray, n_fft: int, g_full: int):
    """(BC, T) -> (BC*g_full, 2*n_fft); super-row g = signal[g*n_fft:(g+2)*n_fft].

    Built from two shifted non-overlapping chunkings (slice + concat), so the
    frame HBM duplication is 2x instead of the 4x of per-frame gathering.
    """
    BC, _ = sig2d.shape
    chunks = sig2d[:, :(g_full + 1) * n_fft].reshape(BC, g_full + 1, n_fft)
    sup = jnp.concatenate([chunks[:, :-1, :], chunks[:, 1:, :]], axis=-1)
    return sup.reshape(BC * g_full, 2 * n_fft)
# TODO(synk): in-kernel framing of the raw signal via manual strided DMA
# (memory_space=pl.ANY) would remove even the remaining 2x duplication (v5e).


# ---------------------------------------------------------------------------
# Pallas kernel: fused folded-STFT + distance partial sums for one tile of
# super-rows.  Outputs are (1, 8, half) per-lane partial-sum blocks resident
# across the tile axis; the single cross-lane reduction happens in JAX.
# ---------------------------------------------------------------------------
def _stft_distance_kernel(fx_ref, fy_ref, w_ref, sqdiff_ref, sqx_ref, absld_ref):
    i = pl.program_id(1)

    @pl.when(i == 0)
    def _():
        sqdiff_ref[...] = jnp.zeros_like(sqdiff_ref)
        sqx_ref[...] = jnp.zeros_like(sqx_ref)
        absld_ref[...] = jnp.zeros_like(absld_ref)

    # bf16 frames/basis on the MXU, f32 accumulation.
    zx = jnp.dot(fx_ref[...], w_ref[...], preferred_element_type=jnp.float32)
    zy = jnp.dot(fy_ref[...], w_ref[...], preferred_element_type=jnp.float32)

    h = zx.shape[-1] // 2                    # Re | Im split point (128-aligned)
    xr, xi = zx[:, :h], zx[:, h:]
    yr, yi = zy[:, :h], zy[:, h:]

    px = xr * xr + xi * xi                   # |STFT x|^2   (tile, h)
    py = yr * yr + yi * yi

    # (sx - sy)^2 with a single EUP sqrt; zero lanes give exactly 0.
    d2 = px + py - 2.0 * jnp.sqrt(px * py)
    # |log sx - log sy| = 0.5*|log(px+eps^2) - log(py+eps^2)|; the 0.5 is
    # applied once in the JAX epilogue.  Zero lanes give exactly 0.
    ald = jnp.abs(jnp.log(px + EPS_SQ) - jnp.log(py + EPS_SQ))

    t = d2.shape[0]
    # Fold sublane groups with pure VPU adds; no per-step cross-lane reduction.
    sqdiff_ref[...] += d2.reshape(t // 8, 8, h).sum(axis=0, keepdims=True)
    sqx_ref[...] += px.reshape(t // 8, 8, h).sum(axis=0, keepdims=True)
    absld_ref[...] += ald.reshape(t // 8, 8, h).sum(axis=0, keepdims=True)


def _scale_sums(fx, fy, w, num_splits):
    """Run the Pallas kernel over all super-row tiles for one STFT scale."""
    G, K = fx.shape                          # super-rows, 2*n_fft
    N = w.shape[1]
    h = N // 2

    if G < 2 * MIN_SUPER_TILE:
        num_splits = 1                       # don't halve tiny inputs across cores
    tile = max(MIN_SUPER_TILE,
               min(MAX_SUPER_TILE,
                   _round_up(pl.cdiv(G, num_splits), MIN_SUPER_TILE)))
    tiles_per_split = pl.cdiv(G, num_splits * tile)
    padded = num_splits * tiles_per_split * tile
    pad = padded - G
    if pad:
        # All-zero super-rows contribute exactly 0 to every accumulated sum.
        # TODO(synk): in-kernel tail-row masking would avoid this extra HBM pass.
        fx = jnp.pad(fx, ((0, pad), (0, 0)))
        fy = jnp.pad(fy, ((0, pad), (0, 0)))

    frame_spec = pl.BlockSpec((tile, K), lambda c, i: (c * tiles_per_split + i, 0))
    basis_spec = pl.BlockSpec((K, N), lambda c, i: (0, 0))
    acc_spec = pl.BlockSpec((1, 8, h), lambda c, i: (c, 0, 0))

    sums = pl.pallas_call(
        _stft_distance_kernel,
        out_shape=[jax.ShapeDtypeStruct((num_splits, 8, h), jnp.float32)] * 3,
        grid_spec=pltpu.PrefetchScalarGridSpec(
            num_scalar_prefetch=0,
            grid=(num_splits, tiles_per_split),
            in_specs=[frame_spec, frame_spec, basis_spec],
            out_specs=[acc_spec, acc_spec, acc_spec],
        ),
        compiler_params=pltpu.CompilerParams(
            dimension_semantics=("parallel", "arbitrary"),
            vmem_limit_bytes=VMEM_LIMIT_BYTES),
    )(fx, fy, w)

    # Single cross-lane reduction per sum, done once in plain JAX.
    return [jnp.sum(s) for s in sums]


def _tail_sums(sig_x, sig_y, n_fft, hop, first_frame, n_tail):
    """Exact f32 contribution of the <=3 frames that don't fill a super-row."""
    starts = (first_frame + jnp.arange(n_tail)) * hop
    idx = starts[:, None] + jnp.arange(n_fft)[None, :]
    fx = sig_x[:, idx].reshape(-1, n_fft)
    fy = sig_y[:, idx].reshape(-1, n_fft)
    wr_np, wi_np = _dft_mats(n_fft)
    wr, wi = jnp.asarray(wr_np), jnp.asarray(wi_np)
    sx = jnp.sqrt((fx @ wr) ** 2 + (fx @ wi) ** 2)
    sy = jnp.sqrt((fy @ wr) ** 2 + (fy @ wi) ** 2)
    sqdiff = jnp.sum((sx - sy) ** 2)
    sqx = jnp.sum(sx * sx)
    absld = jnp.sum(jnp.abs(jnp.log(sx + LOG_EPSILON) - jnp.log(sy + LOG_EPSILON)))
    return sqdiff, sqx, absld


# ---------------------------------------------------------------------------
# SpectralDistance.forward (multiscale magnitude-STFT distance), one jit.
# ---------------------------------------------------------------------------
@jax.jit
def spectral_distance(x, y):
    B, C, T = x.shape
    sig_x = x.reshape(B * C, T)
    sig_y = y.reshape(B * C, T)
    # bf16 once, before framing: frames are only ever materialized in bf16.
    sig_x_bf = sig_x.astype(jnp.bfloat16)
    sig_y_bf = sig_y.astype(jnp.bfloat16)
    num_splits = _num_tensorcore_splits()

    # TODO(synk): for very short clips both scales could be fused into one
    # pallas_call (scalar-prefetched basis select) to halve launch overhead.
    distance = jnp.float32(0.0)
    for n_fft in SCALES:
        hop = n_fft // OVERLAP
        F = 1 + (T - n_fft) // hop           # frames per signal row
        G = F // OVERLAP                     # full super-rows per signal row
        n_tail = F - OVERLAP * G             # leftover frames (0..3) per row
        w, n_bins, _ = _make_folded_basis(n_fft)

        sqdiff = jnp.float32(0.0)
        sqx = jnp.float32(0.0)
        absld = jnp.float32(0.0)
        if G > 0:
            fxs = _super_frames(sig_x_bf, n_fft, G)
            fys = _super_frames(sig_y_bf, n_fft, G)
            kd, kx, kl = _scale_sums(fxs, fys, w, num_splits)
            sqdiff = sqdiff + kd
            sqx = sqx + kx
            absld = absld + 0.5 * kl         # 0.5 from the |log px - log py| form
        if n_tail > 0:
            td, tx, tl = _tail_sums(sig_x, sig_y, n_fft, hop, OVERLAP * G, n_tail)
            sqdiff = sqdiff + td
            sqx = sqx + tx
            absld = absld + tl

        n_elems = B * C * F * n_bins                 # true element count
        lin_distance = sqdiff / sqx                  # mean((x-y)^2)/mean(x^2)
        log_distance = absld / n_elems               # mean(|log x - log y|)
        distance = distance + lin_distance + log_distance
    return {'spectral_distance': distance}


# Pure-JAX f32 reference for correctness checking.
def _reference(x, y):
    B, C, T = x.shape
    sig_x = x.reshape(B * C, T)
    sig_y = y.reshape(B * C, T)
    total = jnp.float32(0.0)
    for n_fft in SCALES:
        hop = n_fft // OVERLAP
        F = 1 + (T - n_fft) // hop
        starts = jnp.arange(F) * hop
        idx = starts[:, None] + jnp.arange(n_fft)[None, :]
        fx = sig_x[:, idx].reshape(-1, n_fft)
        fy = sig_y[:, idx].reshape(-1, n_fft)
        wr_np, wi_np = _dft_mats(n_fft)
        wr, wi = jnp.asarray(wr_np), jnp.asarray(wi_np)
        sx = jnp.sqrt((fx @ wr) ** 2 + (fx @ wi) ** 2)
        sy = jnp.sqrt((fy @ wr) ** 2 + (fy @ wi) ** 2)
        lin = jnp.mean((sx - sy) ** 2) / jnp.mean(sx * sx)
        logd = jnp.mean(jnp.abs(jnp.log(sx + LOG_EPSILON) - jnp.log(sy + LOG_EPSILON)))
        total = total + lin + logd
    return total


if __name__ == "__main__":
    key = jax.random.PRNGKey(0)
    kx, ky = jax.random.split(key)
    B, C, T = 2, 1, 256                      # (batch, channels, samples)
    x = jax.random.normal(kx, (B, C, T), dtype=jnp.float32)
    y = x + 0.1 * jax.random.normal(ky, (B, C, T), dtype=jnp.float32)

    out = spectral_distance(x, y)
    dist = jax.block_until_ready(out['spectral_distance'])

    ref = _reference(x, y)
    # bf16 MXU inputs: ~0.5% expected deviation from the f32 reference.
    np.testing.assert_allclose(np.asarray(dist), np.asarray(ref),
                               rtol=2e-2, atol=1e-3)
    print("KERNEL_OK")
</pallas_src>

<mosaic_0001>
module attributes {stable_mosaic.version = 11 : i64} {
  func.func @_stft_distance_kernel(%arg0: i32, %arg1: i32, %arg2: memref<16x128xbf16, #tpu.memory_space<vmem>>, %arg3: memref<16x128xbf16, #tpu.memory_space<vmem>>, %arg4: memref<128x512xbf16, #tpu.memory_space<vmem>>, %arg5: memref<1x8x256xf32, #tpu.memory_space<vmem>>, %arg6: memref<1x8x256xf32, #tpu.memory_space<vmem>>, %arg7: memref<1x8x256xf32, #tpu.memory_space<vmem>>) attributes {dimension_semantics = [#tpu.dimension_semantics<parallel>, #tpu.dimension_semantics<arbitrary>], iteration_bounds = array<i64: 1, 1>, scalar_prefetch = 0 : i64, scratch_operands = 0 : i64, tpu.core_type = #tpu.core_type<tc>, window_params = [{transform_indices = @transform_0, window_bounds = array<i64: 16, 128>}, {transform_indices = @transform_1, window_bounds = array<i64: 16, 128>}, {pipeline_mode = #tpu.pipeline_mode<synchronous>, transform_indices = @transform_2, window_bounds = array<i64: 128, 512>}, {transform_indices = @transform_3, window_bounds = array<i64: 1, 8, 256>}, {transform_indices = @transform_4, window_bounds = array<i64: 1, 8, 256>}, {transform_indices = @transform_5, window_bounds = array<i64: 1, 8, 256>}]} {
    %c0_i32 = arith.constant 0 : i32
    %0 = arith.cmpi eq, %arg1, %c0_i32 : i32
    %1 = arith.extui %0 : i1 to i32
    %c0_i32_0 = arith.constant 0 : i32
    %2 = arith.cmpi ne, %1, %c0_i32_0 : i32
    scf.if %2 {
      %cst_33 = arith.constant 0.000000e+00 : f32
      %51 = vector.broadcast %cst_33 : f32 to vector<1x8x256xf32>
      %c0_34 = arith.constant 0 : index
      %c0_35 = arith.constant 0 : index
      %c0_36 = arith.constant 0 : index
      %52 = vector.load %arg5[%c0_34, %c0_35, %c0_36] : memref<1x8x256xf32, #tpu.memory_space<vmem>>, vector<1x8x256xf32>
      tpu.vector_store %arg5[%c0_34, %c0_35, %c0_36], %51 {strides = array<i32>} : memref<1x8x256xf32, #tpu.memory_space<vmem>>, vector<1x8x256xf32>,
      %cst_37 = arith.constant 0.000000e+00 : f32
      %53 = vector.broadcast %cst_37 : f32 to vector<1x8x256xf32>
      %c0_38 = arith.constant 0 : index
      %c0_39 = arith.constant 0 : index
      %c0_40 = arith.constant 0 : index
      %54 = vector.load %arg6[%c0_38, %c0_39, %c0_40] : memref<1x8x256xf32, #tpu.memory_space<vmem>>, vector<1x8x256xf32>
      tpu.vector_store %arg6[%c0_38, %c0_39, %c0_40], %53 {strides = array<i32>} : memref<1x8x256xf32, #tpu.memory_space<vmem>>, vector<1x8x256xf32>,
      %cst_41 = arith.constant 0.000000e+00 : f32
      %55 = vector.broadcast %cst_41 : f32 to vector<1x8x256xf32>
      %c0_42 = arith.constant 0 : index
      %c0_43 = arith.constant 0 : index
      %c0_44 = arith.constant 0 : index
      %56 = vector.load %arg7[%c0_42, %c0_43, %c0_44] : memref<1x8x256xf32, #tpu.memory_space<vmem>>, vector<1x8x256xf32>
      tpu.vector_store %arg7[%c0_42, %c0_43, %c0_44], %55 {strides = array<i32>} : memref<1x8x256xf32, #tpu.memory_space<vmem>>, vector<1x8x256xf32>,
    } else {
    }
    %c0 = arith.constant 0 : index
    %c0_1 = arith.constant 0 : index
    %3 = vector.load %arg2[%c0, %c0_1] : memref<16x128xbf16, #tpu.memory_space<vmem>>, vector<16x128xbf16>
    %c0_2 = arith.constant 0 : index
    %c0_3 = arith.constant 0 : index
    %4 = vector.load %arg4[%c0_2, %c0_3] : memref<128x512xbf16, #tpu.memory_space<vmem>>, vector<128x512xbf16>
    %cst = arith.constant dense<0.000000e+00> : vector<16x512xf32>
    %5 = tpu.matmul %3, %4, %cst {dimension_numbers = #tpu.dot_dimension_numbers<[1], [0], [0], [1], [0, 0, 1, 1], [], []>} : vector<16x128xbf16>, vector<128x512xbf16>, vector<16x512xf32> -> vector<16x512xf32>
    %c0_4 = arith.constant 0 : index
    %c0_5 = arith.constant 0 : index
    %6 = vector.load %arg3[%c0_4, %c0_5] : memref<16x128xbf16, #tpu.memory_space<vmem>>, vector<16x128xbf16>
    %c0_6 = arith.constant 0 : index
    %c0_7 = arith.constant 0 : index
    %7 = vector.load %arg4[%c0_6, %c0_7] : memref<128x512xbf16, #tpu.memory_space<vmem>>, vector<128x512xbf16>
    %cst_8 = arith.constant dense<0.000000e+00> : vector<16x512xf32>
    %8 = tpu.matmul %6, %7, %cst_8 {dimension_numbers = #tpu.dot_dimension_numbers<[1], [0], [0], [1], [0, 0, 1, 1], [], []>} : vector<16x128xbf16>, vector<128x512xbf16>, vector<16x512xf32> -> vector<16x512xf32>
    %9 = vector.extract_strided_slice %5 {offsets = [0, 0], sizes = [16, 256], strides = [1, 1]} : vector<16x512xf32> to vector<16x256xf32>
    %10 = vector.extract_strided_slice %5 {offsets = [0, 256], sizes = [16, 256], strides = [1, 1]} : vector<16x512xf32> to vector<16x256xf32>
    %11 = vector.extract_strided_slice %8 {offsets = [0, 0], sizes = [16, 256], strides = [1, 1]} : vector<16x512xf32> to vector<16x256xf32>
    %12 = vector.extract_strided_slice %8 {offsets = [0, 256], sizes = [16, 256], strides = [1, 1]} : vector<16x512xf32> to vector<16x256xf32>
    %13 = arith.mulf %9, %9 : vector<16x256xf32>
    %14 = arith.mulf %10, %10 : vector<16x256xf32>
    %15 = arith.addf %13, %14 : vector<16x256xf32>
    %16 = arith.mulf %11, %11 : vector<16x256xf32>
    %17 = arith.mulf %12, %12 : vector<16x256xf32>
    %18 = arith.addf %16, %17 : vector<16x256xf32>
    %19 = arith.addf %15, %18 : vector<16x256xf32>
    %20 = arith.mulf %15, %18 : vector<16x256xf32>
    %21 = math.sqrt %20 : vector<16x256xf32>
    %cst_9 = arith.constant 2.000000e+00 : f32
    %22 = vector.broadcast %cst_9 : f32 to vector<16x256xf32>
    %23 = arith.mulf %22, %21 : vector<16x256xf32>
    %24 = arith.subf %19, %23 : vector<16x256xf32>
    %cst_10 = arith.constant 9.99999982E-15 : f32
    %25 = vector.broadcast %cst_10 : f32 to vector<16x256xf32>
    %26 = arith.addf %15, %25 : vector<16x256xf32>
    %27 = math.log %26 : vector<16x256xf32>
    %cst_11 = arith.constant 9.99999982E-15 : f32
    %28 = vector.broadcast %cst_11 : f32 to vector<16x256xf32>
    %29 = arith.addf %18, %28 : vector<16x256xf32>
    %30 = math.log %29 : vector<16x256xf32>
    %31 = arith.subf %27, %30 : vector<16x256xf32>
    %32 = math.absf %31 : vector<16x256xf32>
    %c0_12 = arith.constant 0 : index
    %c0_13 = arith.constant 0 : index
    %c0_14 = arith.constant 0 : index
    %33 = vector.load %arg5[%c0_12, %c0_13, %c0_14] : memref<1x8x256xf32, #tpu.memory_space<vmem>>, vector<1x8x256xf32>
    %34 = vector.shape_cast %24 : vector<16x256xf32> to vector<2x8x256xf32>
    %cst_15 = arith.constant dense<0.000000e+00> : vector<8x256xf32>
    %35 = vector.multi_reduction <add>, %34, %cst_15 [0] : vector<2x8x256xf32> to vector<8x256xf32>
    %36 = vector.shape_cast %35 : vector<8x256xf32> to vector<1x8x256xf32>
    %37 = arith.addf %33, %36 : vector<1x8x256xf32>
    %c0_16 = arith.constant 0 : index
    %c0_17 = arith.constant 0 : index
    %c0_18 = arith.constant 0 : index
    %38 = vector.load %arg5[%c0_16, %c0_17, %c0_18] : memref<1x8x256xf32, #tpu.memory_space<vmem>>, vector<1x8x256xf32>
    tpu.vector_store %arg5[%c0_16, %c0_17, %c0_18], %37 {strides = array<i32>} : memref<1x8x256xf32, #tpu.memory_space<vmem>>, vector<1x8x256xf32>,
    %c0_19 = arith.constant 0 : index
    %c0_20 = arith.constant 0 : index
    %c0_21 = arith.constant 0 : index
    %39 = vector.load %arg6[%c0_19, %c0_20, %c0_21] : memref<1x8x256xf32, #tpu.memory_space<vmem>>, vector<1x8x256xf32>
    %40 = vector.shape_cast %15 : vector<16x256xf32> to vector<2x8x256xf32>
    %cst_22 = arith.constant dense<0.000000e+00> : vector<8x256xf32>
    %41 = vector.multi_reduction <add>, %40, %cst_22 [0] : vector<2x8x256xf32> to vector<8x256xf32>
    %42 = vector.shape_cast %41 : vector<8x256xf32> to vector<1x8x256xf32>
    %43 = arith.addf %39, %42 : vector<1x8x256xf32>
    %c0_23 = arith.constant 0 : index
    %c0_24 = arith.constant 0 : index
    %c0_25 = arith.constant 0 : index
    %44 = vector.load %arg6[%c0_23, %c0_24, %c0_25] : memref<1x8x256xf32, #tpu.memory_space<vmem>>, vector<1x8x256xf32>
    tpu.vector_store %arg6[%c0_23, %c0_24, %c0_25], %43 {strides = array<i32>} : memref<1x8x256xf32, #tpu.memory_space<vmem>>, vector<1x8x256xf32>,
    %c0_26 = arith.constant 0 : index
    %c0_27 = arith.constant 0 : index
    %c0_28 = arith.constant 0 : index
    %45 = vector.load %arg7[%c0_26, %c0_27, %c0_28] : memref<1x8x256xf32, #tpu.memory_space<vmem>>, vector<1x8x256xf32>
    %46 = vector.shape_cast %32 : vector<16x256xf32> to vector<2x8x256xf32>
    %cst_29 = arith.constant dense<0.000000e+00> : vector<8x256xf32>
    %47 = vector.multi_reduction <add>, %46, %cst_29 [0] : vector<2x8x256xf32> to vector<8x256xf32>
    %48 = vector.shape_cast %47 : vector<8x256xf32> to vector<1x8x256xf32>
    %49 = arith.addf %45, %48 : vector<1x8x256xf32>
    %c0_30 = arith.constant 0 : index
    %c0_31 = arith.constant 0 : index
    %c0_32 = arith.constant 0 : index
    %50 = vector.load %arg7[%c0_30, %c0_31, %c0_32] : memref<1x8x256xf32, #tpu.memory_space<vmem>>, vector<1x8x256xf32>
    tpu.vector_store %arg7[%c0_30, %c0_31, %c0_32], %49 {strides = array<i32>} : memref<1x8x256xf32, #tpu.memory_space<vmem>>, vector<1x8x256xf32>,
    return
  }
  func.func @transform_0(%arg0: i32, %arg1: i32) -> (i32, i32) {
    %c1_i32 = arith.constant 1 : i32
    %0 = arith.muli %arg0, %c1_i32 : i32
    %1 = arith.addi %0, %arg1 : i32
    %c0_i32 = arith.constant 0 : i32
    %c0_i32_0 = arith.constant 0 : i32
    return %1, %c0_i32 : i32, i32
  }
  func.func @transform_1(%arg0: i32, %arg1: i32) -> (i32, i32) {
    %c1_i32 = arith.constant 1 : i32
    %0 = arith.muli %arg0, %c1_i32 : i32
    %1 = arith.addi %0, %arg1 : i32
    %c0_i32 = arith.constant 0 : i32
    %c0_i32_0 = arith.constant 0 : i32
    return %1, %c0_i32 : i32, i32
  }
  func.func @transform_2(%arg0: i32, %arg1: i32) -> (i32, i32) {
    %c0_i32 = arith.constant 0 : i32
    %c0_i32_0 = arith.constant 0 : i32
    %c0_i32_1 = arith.constant 0 : i32
    return %c0_i32, %c0_i32_0 : i32, i32
  }
  func.func @transform_3(%arg0: i32, %arg1: i32) -> (i32, i32, i32) {
    %c0_i32 = arith.constant 0 : i32
    %c0_i32_0 = arith.constant 0 : i32
    %c0_i32_1 = arith.constant 0 : i32
    return %arg0, %c0_i32, %c0_i32_0 : i32, i32, i32
  }
  func.func @transform_4(%arg0: i32, %arg1: i32) -> (i32, i32, i32) {
    %c0_i32 = arith.constant 0 : i32
    %c0_i32_0 = arith.constant 0 : i32
    %c0_i32_1 = arith.constant 0 : i32
    return %arg0, %c0_i32, %c0_i32_0 : i32, i32, i32
  }
  func.func @transform_5(%arg0: i32, %arg1: i32) -> (i32, i32, i32) {
    %c0_i32 = arith.constant 0 : i32
    %c0_i32_0 = arith.constant 0 : i32
    %c0_i32_1 = arith.constant 0 : i32
    return %arg0, %c0_i32, %c0_i32_0 : i32, i32, i32
  }
}

module attributes {stable_mosaic.version = 11 : i64} {
  func.func @_stft_distance_kernel(%arg0: i32, %arg1: i32, %arg2: memref<16x64xbf16, #tpu.memory_space<vmem>>, %arg3: memref<16x64xbf16, #tpu.memory_space<vmem>>, %arg4: memref<64x256xbf16, #tpu.memory_space<vmem>>, %arg5: memref<1x8x128xf32, #tpu.memory_space<vmem>>, %arg6: memref<1x8x128xf32, #tpu.memory_space<vmem>>, %arg7: memref<1x8x128xf32, #tpu.memory_space<vmem>>) attributes {dimension_semantics = [#tpu.dimension_semantics<parallel>, #tpu.dimension_semantics<arbitrary>], iteration_bounds = array<i64: 1, 1>, scalar_prefetch = 0 : i64, scratch_operands = 0 : i64, tpu.core_type = #tpu.core_type<tc>, window_params = [{transform_indices = @transform_0, window_bounds = array<i64: 16, 64>}, {transform_indices = @transform_1, window_bounds = array<i64: 16, 64>}, {pipeline_mode = #tpu.pipeline_mode<synchronous>, transform_indices = @transform_2, window_bounds = array<i64: 64, 256>}, {transform_indices = @transform_3, window_bounds = array<i64: 1, 8, 128>}, {transform_indices = @transform_4, window_bounds = array<i64: 1, 8, 128>}, {transform_indices = @transform_5, window_bounds = array<i64: 1, 8, 128>}]} {
    %c0_i32 = arith.constant 0 : i32
    %0 = arith.cmpi eq, %arg1, %c0_i32 : i32
    %1 = arith.extui %0 : i1 to i32
    %c0_i32_0 = arith.constant 0 : i32
    %2 = arith.cmpi ne, %1, %c0_i32_0 : i32
    scf.if %2 {
      %cst_33 = arith.constant 0.000000e+00 : f32
      %51 = vector.broadcast %cst_33 : f32 to vector<1x8x128xf32>
      %c0_34 = arith.constant 0 : index
      %c0_35 = arith.constant 0 : index
      %c0_36 = arith.constant 0 : index
      %52 = vector.load %arg5[%c0_34, %c0_35, %c0_36] : memref<1x8x128xf32, #tpu.memory_space<vmem>>, vector<1x8x128xf32>
      tpu.vector_store %arg5[%c0_34, %c0_35, %c0_36], %51 {strides = array<i32>} : memref<1x8x128xf32, #tpu.memory_space<vmem>>, vector<1x8x128xf32>,
      %cst_37 = arith.constant 0.000000e+00 : f32
      %53 = vector.broadcast %cst_37 : f32 to vector<1x8x128xf32>
      %c0_38 = arith.constant 0 : index
      %c0_39 = arith.constant 0 : index
      %c0_40 = arith.constant 0 : index
      %54 = vector.load %arg6[%c0_38, %c0_39, %c0_40] : memref<1x8x128xf32, #tpu.memory_space<vmem>>, vector<1x8x128xf32>
      tpu.vector_store %arg6[%c0_38, %c0_39, %c0_40], %53 {strides = array<i32>} : memref<1x8x128xf32, #tpu.memory_space<vmem>>, vector<1x8x128xf32>,
      %cst_41 = arith.constant 0.000000e+00 : f32
      %55 = vector.broadcast %cst_41 : f32 to vector<1x8x128xf32>
      %c0_42 = arith.constant 0 : index
      %c0_43 = arith.constant 0 : index
      %c0_44 = arith.constant 0 : index
      %56 = vector.load %arg7[%c0_42, %c0_43, %c0_44] : memref<1x8x128xf32, #tpu.memory_space<vmem>>, vector<1x8x128xf32>
      tpu.vector_store %arg7[%c0_42, %c0_43, %c0_44], %55 {strides = array<i32>} : memref<1x8x128xf32, #tpu.memory_space<vmem>>, vector<1x8x128xf32>,
    } else {
    }
    %c0 = arith.constant 0 : index
    %c0_1 = arith.constant 0 : index
    %3 = vector.load %arg2[%c0, %c0_1] : memref<16x64xbf16, #tpu.memory_space<vmem>>, vector<16x64xbf16>
    %c0_2 = arith.constant 0 : index
    %c0_3 = arith.constant 0 : index
    %4 = vector.load %arg4[%c0_2, %c0_3] : memref<64x256xbf16, #tpu.memory_space<vmem>>, vector<64x256xbf16>
    %cst = arith.constant dense<0.000000e+00> : vector<16x256xf32>
    %5 = tpu.matmul %3, %4, %cst {dimension_numbers = #tpu.dot_dimension_numbers<[1], [0], [0], [1], [0, 0, 1, 1], [], []>} : vector<16x64xbf16>, vector<64x256xbf16>, vector<16x256xf32> -> vector<16x256xf32>
    %c0_4 = arith.constant 0 : index
    %c0_5 = arith.constant 0 : index
    %6 = vector.load %arg3[%c0_4, %c0_5] : memref<16x64xbf16, #tpu.memory_space<vmem>>, vector<16x64xbf16>
    %c0_6 = arith.constant 0 : index
    %c0_7 = arith.constant 0 : index
    %7 = vector.load %arg4[%c0_6, %c0_7] : memref<64x256xbf16, #tpu.memory_space<vmem>>, vector<64x256xbf16>
    %cst_8 = arith.constant dense<0.000000e+00> : vector<16x256xf32>
    %8 = tpu.matmul %6, %7, %cst_8 {dimension_numbers = #tpu.dot_dimension_numbers<[1], [0], [0], [1], [0, 0, 1, 1], [], []>} : vector<16x64xbf16>, vector<64x256xbf16>, vector<16x256xf32> -> vector<16x256xf32>
    %9 = vector.extract_strided_slice %5 {offsets = [0, 0], sizes = [16, 128], strides = [1, 1]} : vector<16x256xf32> to vector<16x128xf32>
    %10 = vector.extract_strided_slice %5 {offsets = [0, 128], sizes = [16, 128], strides = [1, 1]} : vector<16x256xf32> to vector<16x128xf32>
    %11 = vector.extract_strided_slice %8 {offsets = [0, 0], sizes = [16, 128], strides = [1, 1]} : vector<16x256xf32> to vector<16x128xf32>
    %12 = vector.extract_strided_slice %8 {offsets = [0, 128], sizes = [16, 128], strides = [1, 1]} : vector<16x256xf32> to vector<16x128xf32>
    %13 = arith.mulf %9, %9 : vector<16x128xf32>
    %14 = arith.mulf %10, %10 : vector<16x128xf32>
    %15 = arith.addf %13, %14 : vector<16x128xf32>
    %16 = arith.mulf %11, %11 : vector<16x128xf32>
    %17 = arith.mulf %12, %12 : vector<16x128xf32>
    %18 = arith.addf %16, %17 : vector<16x128xf32>
    %19 = arith.addf %15, %18 : vector<16x128xf32>
    %20 = arith.mulf %15, %18 : vector<16x128xf32>
    %21 = math.sqrt %20 : vector<16x128xf32>
    %cst_9 = arith.constant 2.000000e+00 : f32
    %22 = vector.broadcast %cst_9 : f32 to vector<16x128xf32>
    %23 = arith.mulf %22, %21 : vector<16x128xf32>
    %24 = arith.subf %19, %23 : vector<16x128xf32>
    %cst_10 = arith.constant 9.99999982E-15 : f32
    %25 = vector.broadcast %cst_10 : f32 to vector<16x128xf32>
    %26 = arith.addf %15, %25 : vector<16x128xf32>
    %27 = math.log %26 : vector<16x128xf32>
    %cst_11 = arith.constant 9.99999982E-15 : f32
    %28 = vector.broadcast %cst_11 : f32 to vector<16x128xf32>
    %29 = arith.addf %18, %28 : vector<16x128xf32>
    %30 = math.log %29 : vector<16x128xf32>
    %31 = arith.subf %27, %30 : vector<16x128xf32>
    %32 = math.absf %31 : vector<16x128xf32>
    %c0_12 = arith.constant 0 : index
    %c0_13 = arith.constant 0 : index
    %c0_14 = arith.constant 0 : index
    %33 = vector.load %arg5[%c0_12, %c0_13, %c0_14] : memref<1x8x128xf32, #tpu.memory_space<vmem>>, vector<1x8x128xf32>
    %34 = vector.shape_cast %24 : vector<16x128xf32> to vector<2x8x128xf32>
    %cst_15 = arith.constant dense<0.000000e+00> : vector<8x128xf32>
    %35 = vector.multi_reduction <add>, %34, %cst_15 [0] : vector<2x8x128xf32> to vector<8x128xf32>
    %36 = vector.shape_cast %35 : vector<8x128xf32> to vector<1x8x128xf32>
    %37 = arith.addf %33, %36 : vector<1x8x128xf32>
    %c0_16 = arith.constant 0 : index
    %c0_17 = arith.constant 0 : index
    %c0_18 = arith.constant 0 : index
    %38 = vector.load %arg5[%c0_16, %c0_17, %c0_18] : memref<1x8x128xf32, #tpu.memory_space<vmem>>, vector<1x8x128xf32>
    tpu.vector_store %arg5[%c0_16, %c0_17, %c0_18], %37 {strides = array<i32>} : memref<1x8x128xf32, #tpu.memory_space<vmem>>, vector<1x8x128xf32>,
    %c0_19 = arith.constant 0 : index
    %c0_20 = arith.constant 0 : index
    %c0_21 = arith.constant 0 : index
    %39 = vector.load %arg6[%c0_19, %c0_20, %c0_21] : memref<1x8x128xf32, #tpu.memory_space<vmem>>, vector<1x8x128xf32>
    %40 = vector.shape_cast %15 : vector<16x128xf32> to vector<2x8x128xf32>
    %cst_22 = arith.constant dense<0.000000e+00> : vector<8x128xf32>
    %41 = vector.multi_reduction <add>, %40, %cst_22 [0] : vector<2x8x128xf32> to vector<8x128xf32>
    %42 = vector.shape_cast %41 : vector<8x128xf32> to vector<1x8x128xf32>
    %43 = arith.addf %39, %42 : vector<1x8x128xf32>
    %c0_23 = arith.constant 0 : index
    %c0_24 = arith.constant 0 : index
    %c0_25 = arith.constant 0 : index
    %44 = vector.load %arg6[%c0_23, %c0_24, %c0_25] : memref<1x8x128xf32, #tpu.memory_space<vmem>>, vector<1x8x128xf32>
    tpu.vector_store %arg6[%c0_23, %c0_24, %c0_25], %43 {strides = array<i32>} : memref<1x8x128xf32, #tpu.memory_space<vmem>>, vector<1x8x128xf32>,
    %c0_26 = arith.constant 0 : index
    %c0_27 = arith.constant 0 : index
    %c0_28 = arith.constant 0 : index
    %45 = vector.load %arg7[%c0_26, %c0_27, %c0_28] : memref<1x8x128xf32, #tpu.memory_space<vmem>>, vector<1x8x128xf32>
    %46 = vector.shape_cast %32 : vector<16x128xf32> to vector<2x8x128xf32>
    %cst_29 = arith.constant dense<0.000000e+00> : vector<8x128xf32>
    %47 = vector.multi_reduction <add>, %46, %cst_29 [0] : vector<2x8x128xf32> to vector<8x128xf32>
    %48 = vector.shape_cast %47 : vector<8x128xf32> to vector<1x8x128xf32>
    %49 = arith.addf %45, %48 : vector<1x8x128xf32>
    %c0_30 = arith.constant 0 : index
    %c0_31 = arith.constant 0 : index
    %c0_32 = arith.constant 0 : index
    %50 = vector.load %arg7[%c0_30, %c0_31, %c0_32] : memref<1x8x128xf32, #tpu.memory_space<vmem>>, vector<1x8x128xf32>
    tpu.vector_store %arg7[%c0_30, %c0_31, %c0_32], %49 {strides = array<i32>} : memref<1x8x128xf32, #tpu.memory_space<vmem>>, vector<1x8x128xf32>,
    return
  }
  func.func @transform_0(%arg0: i32, %arg1: i32) -> (i32, i32) {
    %c1_i32 = arith.constant 1 : i32
    %0 = arith.muli %arg0, %c1_i32 : i32
    %1 = arith.addi %0, %arg1 : i32
    %c0_i32 = arith.constant 0 : i32
    %c0_i32_0 = arith.constant 0 : i32
    return %1, %c0_i32 : i32, i32
  }
  func.func @transform_1(%arg0: i32, %arg1: i32) -> (i32, i32) {
    %c1_i32 = arith.constant 1 : i32
    %0 = arith.muli %arg0, %c1_i32 : i32
    %1 = arith.addi %0, %arg1 : i32
    %c0_i32 = arith.constant 0 : i32
    %c0_i32_0 = arith.constant 0 : i32
    return %1, %c0_i32 : i32, i32
  }
  func.func @transform_2(%arg0: i32, %arg1: i32) -> (i32, i32) {
    %c0_i32 = arith.constant 0 : i32
    %c0_i32_0 = arith.constant 0 : i32
    %c0_i32_1 = arith.constant 0 : i32
    return %c0_i32, %c0_i32_0 : i32, i32
  }
  func.func @transform_3(%arg0: i32, %arg1: i32) -> (i32, i32, i32) {
    %c0_i32 = arith.constant 0 : i32
    %c0_i32_0 = arith.constant 0 : i32
    %c0_i32_1 = arith.constant 0 : i32
    return %arg0, %c0_i32, %c0_i32_0 : i32, i32, i32
  }
  func.func @transform_4(%arg0: i32, %arg1: i32) -> (i32, i32, i32) {
    %c0_i32 = arith.constant 0 : i32
    %c0_i32_0 = arith.constant 0 : i32
    %c0_i32_1 = arith.constant 0 : i32
    return %arg0, %c0_i32, %c0_i32_0 : i32, i32, i32
  }
  func.func @transform_5(%arg0: i32, %arg1: i32) -> (i32, i32, i32) {
    %c0_i32 = arith.constant 0 : i32
    %c0_i32_0 = arith.constant 0 : i32
    %c0_i32_1 = arith.constant 0 : i32
    return %arg0, %c0_i32, %c0_i32_0 : i32, i32, i32
  }
}

</mosaic_0001>

<llo_original>
// kernel: spectral_distance.3
$region0: #{spectral_distance.3}
  #allocation0 [shape = 'u32[]', space=smem, size = 0x4, offset = 0x4, fixed_abs, tag = 'smem constant byte address 0x4 - core index']
  #allocation1 [shape = 'u32[72,128]{1,0:T(1,128)}', space=vmem, size = 0x9000, scoped, tag = 'internal scratch']
  %s0 = inlined_call_operand.vmem [shape: bf16[16,64], index: 0, kind: input, shape index: {}]
  %s1 = inlined_call_operand.vmem [shape: bf16[16,64], index: 1, kind: input, shape index: {}]
  %s2 = inlined_call_operand.vmem [shape: bf16[64,256], index: 2, kind: input, shape index: {}]
  %s3 = inlined_call_operand.vmem [shape: f32[1,8,128], index: 3, kind: output, shape index: {0}]
  %s4 = inlined_call_operand.vmem [shape: f32[1,8,128], index: 4, kind: output, shape index: {1}]
  %s5 = inlined_call_operand.vmem [shape: f32[1,8,128], index: 5, kind: output, shape index: {2}]
  %6 = xla_tuple %s3, %s4, %s5
  %s7 = sld [smem:[#allocation0]]
  $region42: #{spectral_distance.3} parent=0
    _
  %s9 = ssub.s32 1, %s7
  %s10 = scalar_select 0, %s9, %s7
  // Predicated region
  $region2: #{spectral_distance.3} parent=0 // pred_check
    _
  $region3: #{spectral_distance.3} parent=0 // pred_check_branch
    %12 = sbr.rel (0) target = $region5
  $region4: #{spectral_distance.3} parent=0 // pred_region
    %s13 = sadd.s32 0, 0
    %s14 = smul.u32 2, %s13
    %p15 = scmp.lt.s32.totalorder %s14, 1
    %s16 = scalar_select %p15, %s14, 1
    %s17 = smul.addr %s16, 4
    %s18 = scalar_lea.vmem %s0, %s17
    %s19 = sadd.s32 0, 0
    %s20 = smul.u32 2, %s19
  $region5: #{spectral_distance.3} parent=0 // pred_fallthru
    _
  // Predicated region
  $region6: #{spectral_distance.3} parent=0 // pred_check
    _
  $region7: #{spectral_distance.3} parent=0 // pred_check_branch
    %22 = sbr.rel (0) target = $region9
  $region8: #{spectral_distance.3} parent=0 // pred_region
    %s23 = sadd.s32 0, 0
    %s24 = smul.u32 2, %s23
    %p25 = scmp.lt.s32.totalorder %s24, 1
    %s26 = scalar_select %p25, %s24, 1
    %s27 = smul.addr %s26, 4
    %s28 = scalar_lea.vmem %s1, %s27
    %s29 = sadd.s32 0, 0
    %s30 = smul.u32 2, %s29
  $region9: #{spectral_distance.3} parent=0 // pred_fallthru
    _
  // Predicated region
  $region10: #{spectral_distance.3} parent=0 // pred_check
    _
  $region11: #{spectral_distance.3} parent=0 // pred_check_branch
    %32 = sbr.rel (0) target = $region13
  $region12: #{spectral_distance.3} parent=0 // pred_region
    _
  $region13: #{spectral_distance.3} parent=0 // pred_fallthru
    _
  %s33 = sadd.s32 0, 0
  %s34 = smul.u32 2, %s33
  %p35 = scmp.lt.s32.totalorder %s34, 1
  %s36 = scalar_select %p35, %s34, 1
  %s37 = smul.addr %s36, 4
  %s38 = scalar_lea.vmem %s0, %s37
  %s39 = sadd.s32 0, 0
  %s40 = smul.u32 2, %s39
  %p41 = scmp.lt.s32.totalorder %s40, 1
  %s42 = scalar_select %p41, %s40, 1
  %s43 = smul.addr %s42, 4
  %s44 = scalar_lea.vmem %s1, %s43
  %s45 = sadd.s32 0, 0
  %s46 = smul.u32 2, %s45
  %p47 = scmp.lt.s32.totalorder %s46, 1
  %s48 = scalar_select %p47, %s46, 1
  %s49 = smul.addr %s48, 4
  %s50 = scalar_lea.vmem %s0, %s49
  %s51 = sadd.s32 0, 0
  %s52 = smul.u32 2, %s51
  %s53 = sadd.s32 0, 0
  %s54 = smul.u32 2, %s53
  %p55 = scmp.lt.s32.totalorder %s54, 1
  %s56 = scalar_select %p55, %s54, 1
  %s57 = smul.addr %s56, 4
  %s58 = scalar_lea.vmem %s1, %s57
  %s59 = sadd.s32 0, 0
  %s60 = smul.u32 2, %s59
  %p62 = scmp.eq.s32.totalorder 0, 0
  // Predicated region
  $region14: #{spectral_distance.3} parent=0 // pred_check
    %p63 = pneg %p62
  $region15: #{spectral_distance.3} parent=0 // pred_check_branch
    %65 = sbr.rel (%p63) target = $region17
  $region16: #{spectral_distance.3} parent=0 // pred_region
    %66 = vst [vmem:[%s3] sm:$0xff] 0.0
    %67 = vst [vmem:[%s4] sm:$0xff] 0.0
    %68 = vst [vmem:[%s5] sm:$0xff] 0.0
  $region17: #{spectral_distance.3} parent=0 // pred_fallthru
    _
  %v69 = vld [vmem:[%s50] sm:$0xf]
  %v70 = vld [vmem:[%s50 + $0x4] sm:$0xf]
  %v71 = vld [vmem:[%s2] sm:$0xff]
  %v72 = vld [vmem:[%s2 + $0x8] sm:$0xff]
  %v73 = vld [vmem:[%s2 + $0x10] sm:$0xff]
  %v74 = vld [vmem:[%s2 + $0x18] sm:$0xff]
  %v75 = vld [vmem:[%s2 + $0x20] sm:$0xff]
  %v76 = vld [vmem:[%s2 + $0x28] sm:$0xff]
  %v77 = vld [vmem:[%s2 + $0x30] sm:$0xff]
  %v78 = vld [vmem:[%s2 + $0x38] sm:$0xff]
  %v81 = vunpack.c.l.b16 %v69
  %v82 = vunpack.c.l.b16 %v70
  %v83 = vpack.c.b16 %v82, %v81
  %v92 = vunpack.c.l.b16 %v71
  %v93 = vunpack.c.h.b16 %v71
  %v94 = vunpack.c.l.b16 %v72
  %v95 = vunpack.c.h.b16 %v72
  %v96 = vunpack.c.l.b16 %v73
  %v97 = vunpack.c.h.b16 %v73
  %v98 = vunpack.c.l.b16 %v74
  %v99 = vunpack.c.h.b16 %v74
  %v100 = vunpack.c.l.b16 %v75
  %v101 = vunpack.c.h.b16 %v75
  %v102 = vunpack.c.l.b16 %v76
  %v103 = vunpack.c.h.b16 %v76
  %v104 = vunpack.c.l.b16 %v77
  %v105 = vunpack.c.h.b16 %v77
  %v106 = vunpack.c.l.b16 %v78
  %v107 = vunpack.c.h.b16 %v78
  %v108 = vpack.c.b16 %v94, %v92
  %v109 = vpack.c.b16 %v95, %v93
  %v110 = vpack.c.b16 %v98, %v96
  %v111 = vpack.c.b16 %v99, %v97
  %v112 = vpack.c.b16 %v102, %v100
  %v113 = vpack.c.b16 %v103, %v101
  %v114 = vpack.c.b16 %v106, %v104
  %v115 = vpack.c.b16 %v107, %v105
  %vm124 = vcmask 523264
  %v126 = vsel %vm124, %v83, 0
  %128 = vmatpush.bf16.msra.mxu0 0
  %129 = vmatpush.bf16.msra.mxu0 0
  %130 = vmatpush.bf16.msra.mxu0 0
  %131 = vmatpush.bf16.msra.mxu0 0
  %132 = vmatpush.bf16.msra.mxu0 %v114
  %133 = vmatpush.bf16.msra.mxu0 %v112
  %134 = vmatpush.bf16.msra.mxu0 %v110
  %135 = vmatpush.bf16.msra.mxu0 %v108
  %136 = vmatmul.bf16.gmra.mxu0 %v126
  %v137 = vpop.f32.mrf.mxu0
  %v138 = vadd.f32 0.0, %v137
  %v139 = vpop.f32.mrf.mxu0
  %v140 = vadd.f32 0.0, %v139
  %141 = vdwg.mxu0
  %142 = vmatpush.bf16.msra.mxu0 0
  %143 = vmatpush.bf16.msra.mxu0 0
  %144 = vmatpush.bf16.msra.mxu0 0
  %145 = vmatpush.bf16.msra.mxu0 0
  %146 = vmatpush.bf16.msra.mxu0 %v115
  %147 = vmatpush.bf16.msra.mxu0 %v113
  %148 = vmatpush.bf16.msra.mxu0 %v111
  %149 = vmatpush.bf16.msra.mxu0 %v109
  %150 = vmatmul.bf16.gmra.mxu0 %v126
  %v151 = vpop.f32.mrf.mxu0
  %v152 = vadd.f32 0.0, %v151
  %v153 = vpop.f32.mrf.mxu0
  %v154 = vadd.f32 0.0, %v153
  %155 = vdwg.mxu0
  %v156 = vld [vmem:[%s58] sm:$0xf]
  %v157 = vld [vmem:[%s58 + $0x4] sm:$0xf]
  %v160 = vunpack.c.l.b16 %v156
  %v161 = vunpack.c.l.b16 %v157
  %v162 = vpack.c.b16 %v161, %v160
  %v164 = vsel %vm124, %v162, 0
  %166 = vmatpush.bf16.msra.mxu0 0
  %167 = vmatpush.bf16.msra.mxu0 0
  %168 = vmatpush.bf16.msra.mxu0 0
  %169 = vmatpush.bf16.msra.mxu0 0
  %170 = vmatpush.bf16.msra.mxu0 %v114
  %171 = vmatpush.bf16.msra.mxu0 %v112
  %172 = vmatpush.bf16.msra.mxu0 %v110
  %173 = vmatpush.bf16.msra.mxu0 %v108
  %174 = vmatmul.bf16.gmra.mxu0 %v164
  %v175 = vpop.f32.mrf.mxu0
  %v176 = vadd.f32 0.0, %v175
  %v177 = vpop.f32.mrf.mxu0
  %v178 = vadd.f32 0.0, %v177
  %179 = vdwg.mxu0
  %180 = vmatpush.bf16.msra.mxu0 0
  %181 = vmatpush.bf16.msra.mxu0 0
  %182 = vmatpush.bf16.msra.mxu0 0
  %183 = vmatpush.bf16.msra.mxu0 0
  %184 = vmatpush.bf16.msra.mxu0 %v115
  %185 = vmatpush.bf16.msra.mxu0 %v113
  %186 = vmatpush.bf16.msra.mxu0 %v111
  %187 = vmatpush.bf16.msra.mxu0 %v109
  %188 = vmatmul.bf16.gmra.mxu0 %v164
  %v189 = vpop.f32.mrf.mxu0
  %v190 = vadd.f32 0.0, %v189
  %v191 = vpop.f32.mrf.mxu0
  %v192 = vadd.f32 0.0, %v191
  %193 = vdwg.mxu0
  %v194 = vmul.f32 %v138, %v138
  %v195 = vmul.f32 %v140, %v140
  %v196 = vmul.f32 %v152, %v152
  %v197 = vmul.f32 %v154, %v154
  %v198 = vadd.f32 %v194, %v196
  %v199 = vadd.f32 %v195, %v197
  %v200 = vmul.f32 %v176, %v176
  %v201 = vmul.f32 %v178, %v178
  %v202 = vmul.f32 %v190, %v190
  %v203 = vmul.f32 %v192, %v192
  %v204 = vadd.f32 %v200, %v202
  %v205 = vadd.f32 %v201, %v203
  %v206 = vadd.f32 %v198, %v204
  %v207 = vadd.f32 %v199, %v205
  %v208 = vmul.f32 %v198, %v204
  %v209 = vmul.f32 %v199, %v205
  %v210 = vrsqrt.pop %v208
  %v211 = vmul.f32 %v210, %v208
  %v212 = vmul.f32 %v211, %v210
  %v213 = vmul.f32 0.5, %v212
  %v214 = vsub.f32 1.5, %v213
  %v215 = vmul.f32 %v210, %v214
  %v216 = vmul.f32 %v208, %v215
  %vm217 = vcmp.eq.f32.partialorder %v208, inf
  %v218 = vsel %vm217, %v208, %v216
  %vm219 = vcmp.eq.f32.partialorder %v208, 0.0
  %v220 = vand.u32 %v208, 2147483648
  %v221 = vsel %vm219, %v220, %v218
  %v222 = vrsqrt.pop %v209
  %v223 = vmul.f32 %v222, %v209
  %v224 = vmul.f32 %v223, %v222
  %v225 = vmul.f32 0.5, %v224
  %v226 = vsub.f32 1.5, %v225
  %v227 = vmul.f32 %v222, %v226
  %v228 = vmul.f32 %v209, %v227
  %vm229 = vcmp.eq.f32.partialorder %v209, inf
  %v230 = vsel %vm229, %v209, %v228
  %vm231 = vcmp.eq.f32.partialorder %v209, 0.0
  %v232 = vand.u32 %v209, 2147483648
  %v233 = vsel %vm231, %v232, %v230
  %v234 = vmul.f32 %v221, 2.0
  %v235 = vmul.f32 %v233, 2.0
  %v236 = vsub.f32 %v206, %v234
  %v237 = vsub.f32 %v207, %v235
  %v238 = vadd.f32 %v198, 1e-14
  %v239 = vadd.f32 %v199, 1e-14
  %v240 = vlog2.pop %v238
  %v241 = vmul.f32 %v240, 0.6931472
  %v242 = vlog2.pop %v239
  %v243 = vmul.f32 %v242, 0.6931472
  %v244 = vadd.f32 %v204, 1e-14
  %v245 = vadd.f32 %v205, 1e-14
  %v246 = vlog2.pop %v244
  %v247 = vmul.f32 %v246, 0.6931472
  %v248 = vlog2.pop %v245
  %v249 = vmul.f32 %v248, 0.6931472
  %v250 = vsub.f32 %v241, %v247
  %v251 = vsub.f32 %v243, %v249
  %v252 = vand.u32 2147483647, %v250
  %v253 = vand.u32 2147483647, %v251
  %v254 = vld [vmem:[%s3] sm:$0xff]
  %v255 = vadd.f32 %v236, %v237
  %v256 = vadd.f32 %v254, %v255
  %257 = vst [vmem:[%s3] sm:$0xff] %v256
  %v258 = vld [vmem:[%s4] sm:$0xff]
  %v259 = vadd.f32 %v198, %v199
  %v260 = vadd.f32 %v258, %v259
  %261 = vst [vmem:[%s4] sm:$0xff] %v260
  %v262 = vld [vmem:[%s5] sm:$0xff]
  %v263 = vadd.f32 %v252, %v253
  %v264 = vadd.f32 %v262, %v263
  %265 = vst [vmem:[%s5] sm:$0xff] %v264
  // Predicated region
  $region18: #{spectral_distance.3} parent=0 // pred_check
    _
  $region19: #{spectral_distance.3} parent=0 // pred_check_branch
    %267 = sbr.rel (0) target = $region21
  $region20: #{spectral_distance.3} parent=0 // pred_region
    _
  $region21: #{spectral_distance.3} parent=0 // pred_fallthru
    _
  // Predicated region
  $region22: #{spectral_distance.3} parent=0 // pred_check
    _
  $region23: #{spectral_distance.3} parent=0 // pred_check_branch
    %269 = sbr.rel (0) target = $region25
  $region24: #{spectral_distance.3} parent=0 // pred_region
    _
  $region25: #{spectral_distance.3} parent=0 // pred_fallthru
    _
  // Predicated region
  $region26: #{spectral_distance.3} parent=0 // pred_check
    _
  $region27: #{spectral_distance.3} parent=0 // pred_check_branch
    %271 = sbr.rel (0) target = $region29
  $region28: #{spectral_distance.3} parent=0 // pred_region
    _
  $region29: #{spectral_distance.3} parent=0 // pred_fallthru
    _
  // Predicated region
  $region30: #{spectral_distance.3} parent=0 // pred_check
    _
  $region31: #{spectral_distance.3} parent=0 // pred_check_branch
    %273 = sbr.rel (0) target = $region33
  $region32: #{spectral_distance.3} parent=0 // pred_region
    _
  $region33: #{spectral_distance.3} parent=0 // pred_fallthru
    _
  // Predicated region
  $region34: #{spectral_distance.3} parent=0 // pred_check
    _
  $region35: #{spectral_distance.3} parent=0 // pred_check_branch
    %275 = sbr.rel (0) target = $region37
  $region36: #{spectral_distance.3} parent=0 // pred_region
    _
  $region37: #{spectral_distance.3} parent=0 // pred_fallthru
    _
  // Predicated region
  $region38: #{spectral_distance.3} parent=0 // pred_check
    _
  $region39: #{spectral_distance.3} parent=0 // pred_check_branch
    %277 = sbr.rel (0) target = $region41
  $region40: #{spectral_distance.3} parent=0 // pred_region
    _
  $region41: #{spectral_distance.3} parent=0 // pred_fallthru
    _

// kernel: spectral_distance.2
$region0: #{spectral_distance.2}
  #allocation0 [shape = 'u32[]', space=smem, size = 0x4, offset = 0x4, fixed_abs, tag = 'smem constant byte address 0x4 - core index']
  #allocation1 [shape = 'u32[72,128]{1,0:T(1,128)}', space=vmem, size = 0x9000, scoped, tag = 'internal scratch']
  %s0 = inlined_call_operand.vmem [shape: bf16[16,128], index: 0, kind: input, shape index: {}]
  %s1 = inlined_call_operand.vmem [shape: bf16[16,128], index: 1, kind: input, shape index: {}]
  %s2 = inlined_call_operand.vmem [shape: bf16[128,512], index: 2, kind: input, shape index: {}]
  %s3 = inlined_call_operand.vmem [shape: f32[1,8,256], index: 3, kind: output, shape index: {0}]
  %s4 = inlined_call_operand.vmem [shape: f32[1,8,256], index: 4, kind: output, shape index: {1}]
  %s5 = inlined_call_operand.vmem [shape: f32[1,8,256], index: 5, kind: output, shape index: {2}]
  %6 = xla_tuple %s3, %s4, %s5
  %s7 = sld [smem:[#allocation0]]
  $region42: #{spectral_distance.2} parent=0
    _
  %s9 = ssub.s32 1, %s7
  %s10 = scalar_select 0, %s9, %s7
  // Predicated region
  $region2: #{spectral_distance.2} parent=0 // pred_check
    _
  $region3: #{spectral_distance.2} parent=0 // pred_check_branch
    %12 = sbr.rel (0) target = $region5
  $region4: #{spectral_distance.2} parent=0 // pred_region
    %s13 = sadd.s32 0, 0
    %s14 = smul.u32 2, %s13
    %p15 = scmp.lt.s32.totalorder %s14, 1
    %s16 = scalar_select %p15, %s14, 1
    %s17 = smul.addr %s16, 4
    %s18 = scalar_lea.vmem %s0, %s17
    %s19 = sadd.s32 0, 0
    %s20 = smul.u32 2, %s19
  $region5: #{spectral_distance.2} parent=0 // pred_fallthru
    _
  // Predicated region
  $region6: #{spectral_distance.2} parent=0 // pred_check
    _
  $region7: #{spectral_distance.2} parent=0 // pred_check_branch
    %22 = sbr.rel (0) target = $region9
  $region8: #{spectral_distance.2} parent=0 // pred_region
    %s23 = sadd.s32 0, 0
    %s24 = smul.u32 2, %s23
    %p25 = scmp.lt.s32.totalorder %s24, 1
    %s26 = scalar_select %p25, %s24, 1
    %s27 = smul.addr %s26, 4
    %s28 = scalar_lea.vmem %s1, %s27
    %s29 = sadd.s32 0, 0
    %s30 = smul.u32 2, %s29
  $region9: #{spectral_distance.2} parent=0 // pred_fallthru
    _
  // Predicated region
  $region10: #{spectral_distance.2} parent=0 // pred_check
    _
  $region11: #{spectral_distance.2} parent=0 // pred_check_branch
    %32 = sbr.rel (0) target = $region13
  $region12: #{spectral_distance.2} parent=0 // pred_region
    _
  $region13: #{spectral_distance.2} parent=0 // pred_fallthru
    _
  %s33 = sadd.s32 0, 0
  %s34 = smul.u32 2, %s33
  %p35 = scmp.lt.s32.totalorder %s34, 1
  %s36 = scalar_select %p35, %s34, 1
  %s37 = smul.addr %s36, 4
  %s38 = scalar_lea.vmem %s0, %s37
  %s39 = sadd.s32 0, 0
  %s40 = smul.u32 2, %s39
  %p41 = scmp.lt.s32.totalorder %s40, 1
  %s42 = scalar_select %p41, %s40, 1
  %s43 = smul.addr %s42, 4
  %s44 = scalar_lea.vmem %s1, %s43
  %s45 = sadd.s32 0, 0
  %s46 = smul.u32 2, %s45
  %p47 = scmp.lt.s32.totalorder %s46, 1
  %s48 = scalar_select %p47, %s46, 1
  %s49 = smul.addr %s48, 4
  %s50 = scalar_lea.vmem %s0, %s49
  %s51 = sadd.s32 0, 0
  %s52 = smul.u32 2, %s51
  %s53 = sadd.s32 0, 0
  %s54 = smul.u32 2, %s53
  %p55 = scmp.lt.s32.totalorder %s54, 1
  %s56 = scalar_select %p55, %s54, 1
  %s57 = smul.addr %s56, 4
  %s58 = scalar_lea.vmem %s1, %s57
  %s59 = sadd.s32 0, 0
  %s60 = smul.u32 2, %s59
  %p61 = scmp.eq.s32.totalorder 0, 0
  // Predicated region
  $region14: #{spectral_distance.2} parent=0 // pred_check
    %p62 = pneg %p61
  $region15: #{spectral_distance.2} parent=0 // pred_check_branch
    %64 = sbr.rel (%p62) target = $region17
  $region16: #{spectral_distance.2} parent=0 // pred_region
    %65 = vst [vmem:[%s3] sm:$0xff] 0.0
    %66 = vst [vmem:[%s3 + $0x8] sm:$0xff] 0.0
    %67 = vst [vmem:[%s4] sm:$0xff] 0.0
    %68 = vst [vmem:[%s4 + $0x8] sm:$0xff] 0.0
    %69 = vst [vmem:[%s5] sm:$0xff] 0.0
    %70 = vst [vmem:[%s5 + $0x8] sm:$0xff] 0.0
  $region17: #{spectral_distance.2} parent=0 // pred_fallthru
    _
  %v71 = vld [vmem:[%s50] sm:$0xf]
  %v72 = vld [vmem:[%s50 + $0x4] sm:$0xf]
  %v73 = vld [vmem:[%s2] sm:$0xff]
  %v74 = vld [vmem:[%s2 + $0x8] sm:$0xff]
  %v75 = vld [vmem:[%s2 + $0x10] sm:$0xff]
  %v76 = vld [vmem:[%s2 + $0x18] sm:$0xff]
  %v77 = vld [vmem:[%s2 + $0x20] sm:$0xff]
  %v78 = vld [vmem:[%s2 + $0x28] sm:$0xff]
  %v79 = vld [vmem:[%s2 + $0x30] sm:$0xff]
  %v80 = vld [vmem:[%s2 + $0x38] sm:$0xff]
  %v81 = vld [vmem:[%s2 + $0x40] sm:$0xff]
  %v82 = vld [vmem:[%s2 + $0x48] sm:$0xff]
  %v83 = vld [vmem:[%s2 + $0x50] sm:$0xff]
  %v84 = vld [vmem:[%s2 + $0x58] sm:$0xff]
  %v85 = vld [vmem:[%s2 + $0x60] sm:$0xff]
  %v86 = vld [vmem:[%s2 + $0x68] sm:$0xff]
  %v87 = vld [vmem:[%s2 + $0x70] sm:$0xff]
  %v88 = vld [vmem:[%s2 + $0x78] sm:$0xff]
  %v89 = vld [vmem:[%s2 + $0x80] sm:$0xff]
  %v90 = vld [vmem:[%s2 + $0x88] sm:$0xff]
  %v91 = vld [vmem:[%s2 + $0x90] sm:$0xff]
  %v92 = vld [vmem:[%s2 + $0x98] sm:$0xff]
  %v93 = vld [vmem:[%s2 + $0xa0] sm:$0xff]
  %v94 = vld [vmem:[%s2 + $0xa8] sm:$0xff]
  %v95 = vld [vmem:[%s2 + $0xb0] sm:$0xff]
  %v96 = vld [vmem:[%s2 + $0xb8] sm:$0xff]
  %v97 = vld [vmem:[%s2 + $0xc0] sm:$0xff]
  %v98 = vld [vmem:[%s2 + $0xc8] sm:$0xff]
  %v99 = vld [vmem:[%s2 + $0xd0] sm:$0xff]
  %v100 = vld [vmem:[%s2 + $0xd8] sm:$0xff]
  %v101 = vld [vmem:[%s2 + $0xe0] sm:$0xff]
  %v102 = vld [vmem:[%s2 + $0xe8] sm:$0xff]
  %v103 = vld [vmem:[%s2 + $0xf0] sm:$0xff]
  %v104 = vld [vmem:[%s2 + $0xf8] sm:$0xff]
  %v107 = vunpack.c.l.b16 %v71
  %v108 = vunpack.c.l.b16 %v72
  %v109 = vpack.c.b16 %v108, %v107
  %v143 = vunpack.c.l.b16 %v73
  %v144 = vunpack.c.h.b16 %v73
  %v145 = vunpack.c.l.b16 %v74
  %v146 = vunpack.c.h.b16 %v74
  %v147 = vunpack.c.l.b16 %v75
  %v148 = vunpack.c.h.b16 %v75
  %v149 = vunpack.c.l.b16 %v76
  %v150 = vunpack.c.h.b16 %v76
  %v151 = vunpack.c.l.b16 %v77
  %v152 = vunpack.c.h.b16 %v77
  %v153 = vunpack.c.l.b16 %v78
  %v154 = vunpack.c.h.b16 %v78
  %v155 = vunpack.c.l.b16 %v79
  %v156 = vunpack.c.h.b16 %v79
  %v157 = vunpack.c.l.b16 %v80
  %v158 = vunpack.c.h.b16 %v80
  %v159 = vunpack.c.l.b16 %v81
  %v160 = vunpack.c.h.b16 %v81
  %v161 = vunpack.c.l.b16 %v82
  %v162 = vunpack.c.h.b16 %v82
  %v163 = vunpack.c.l.b16 %v83
  %v164 = vunpack.c.h.b16 %v83
  %v165 = vunpack.c.l.b16 %v84
  %v166 = vunpack.c.h.b16 %v84
  %v167 = vunpack.c.l.b16 %v85
  %v168 = vunpack.c.h.b16 %v85
  %v169 = vunpack.c.l.b16 %v86
  %v170 = vunpack.c.h.b16 %v86
  %v171 = vunpack.c.l.b16 %v87
  %v172 = vunpack.c.h.b16 %v87
  %v173 = vunpack.c.l.b16 %v88
  %v174 = vunpack.c.h.b16 %v88
  %v175 = vunpack.c.l.b16 %v89
  %v176 = vunpack.c.h.b16 %v89
  %v177 = vunpack.c.l.b16 %v90
  %v178 = vunpack.c.h.b16 %v90
  %v179 = vunpack.c.l.b16 %v91
  %v180 = vunpack.c.h.b16 %v91
  %v181 = vunpack.c.l.b16 %v92
  %v182 = vunpack.c.h.b16 %v92
  %v183 = vunpack.c.l.b16 %v93
  %v184 = vunpack.c.h.b16 %v93
  %v185 = vunpack.c.l.b16 %v94
  %v186 = vunpack.c.h.b16 %v94
  %v187 = vunpack.c.l.b16 %v95
  %v188 = vunpack.c.h.b16 %v95
  %v189 = vunpack.c.l.b16 %v96
  %v190 = vunpack.c.h.b16 %v96
  %v191 = vunpack.c.l.b16 %v97
  %v192 = vunpack.c.h.b16 %v97
  %v193 = vunpack.c.l.b16 %v98
  %v194 = vunpack.c.h.b16 %v98
  %v195 = vunpack.c.l.b16 %v99
  %v196 = vunpack.c.h.b16 %v99
  %v197 = vunpack.c.l.b16 %v100
  %v198 = vunpack.c.h.b16 %v100
  %v199 = vunpack.c.l.b16 %v101
  %v200 = vunpack.c.h.b16 %v101
  %v201 = vunpack.c.l.b16 %v102
  %v202 = vunpack.c.h.b16 %v102
  %v203 = vunpack.c.l.b16 %v103
  %v204 = vunpack.c.h.b16 %v103
  %v205 = vunpack.c.l.b16 %v104
  %v206 = vunpack.c.h.b16 %v104
  %v207 = vpack.c.b16 %v147, %v143
  %v208 = vpack.c.b16 %v148, %v144
  %v209 = vpack.c.b16 %v149, %v145
  %v210 = vpack.c.b16 %v150, %v146
  %v211 = vpack.c.b16 %v155, %v151
  %v212 = vpack.c.b16 %v156, %v152
  %v213 = vpack.c.b16 %v157, %v153
  %v214 = vpack.c.b16 %v158, %v154
  %v215 = vpack.c.b16 %v163, %v159
  %v216 = vpack.c.b16 %v164, %v160
  %v217 = vpack.c.b16 %v165, %v161
  %v218 = vpack.c.b16 %v166, %v162
  %v219 = vpack.c.b16 %v171, %v167
  %v220 = vpack.c.b16 %v172, %v168
  %v221 = vpack.c.b16 %v173, %v169
  %v222 = vpack.c.b16 %v174, %v170
  %v223 = vpack.c.b16 %v179, %v175
  %v224 = vpack.c.b16 %v180, %v176
  %v225 = vpack.c.b16 %v181, %v177
  %v226 = vpack.c.b16 %v182, %v178
  %v227 = vpack.c.b16 %v187, %v183
  %v228 = vpack.c.b16 %v188, %v184
  %v229 = vpack.c.b16 %v189, %v185
  %v230 = vpack.c.b16 %v190, %v186
  %v231 = vpack.c.b16 %v195, %v191
  %v232 = vpack.c.b16 %v196, %v192
  %v233 = vpack.c.b16 %v197, %v193
  %v234 = vpack.c.b16 %v198, %v194
  %v235 = vpack.c.b16 %v203, %v199
  %v236 = vpack.c.b16 %v204, %v200
  %v237 = vpack.c.b16 %v205, %v201
  %v238 = vpack.c.b16 %v206, %v202
  %271 = vmatpush.bf16.msra.mxu0 %v235
  %272 = vmatpush.bf16.msra.mxu0 %v231
  %273 = vmatpush.bf16.msra.mxu0 %v227
  %274 = vmatpush.bf16.msra.mxu0 %v223
  %275 = vmatpush.bf16.msra.mxu0 %v219
  %276 = vmatpush.bf16.msra.mxu0 %v215
  %277 = vmatpush.bf16.msra.mxu0 %v211
  %278 = vmatpush.bf16.msra.mxu0 %v207
  %279 = vmatmul.bf16.gmra.mxu0 %v109
  %v280 = vpop.f32.mrf.mxu0
  %v281 = vadd.f32 0.0, %v280
  %v282 = vpop.f32.mrf.mxu0
  %v283 = vadd.f32 0.0, %v282
  %284 = vdwg.mxu0
  %285 = vmatpush.bf16.msra.mxu0 %v236
  %286 = vmatpush.bf16.msra.mxu0 %v232
  %287 = vmatpush.bf16.msra.mxu0 %v228
  %288 = vmatpush.bf16.msra.mxu0 %v224
  %289 = vmatpush.bf16.msra.mxu0 %v220
  %290 = vmatpush.bf16.msra.mxu0 %v216
  %291 = vmatpush.bf16.msra.mxu0 %v212
  %292 = vmatpush.bf16.msra.mxu0 %v208
  %293 = vmatmul.bf16.gmra.mxu0 %v109
  %v294 = vpop.f32.mrf.mxu0
  %v295 = vadd.f32 0.0, %v294
  %v296 = vpop.f32.mrf.mxu0
  %v297 = vadd.f32 0.0, %v296
  %298 = vdwg.mxu0
  %299 = vmatpush.bf16.msra.mxu0 %v237
  %300 = vmatpush.bf16.msra.mxu0 %v233
  %301 = vmatpush.bf16.msra.mxu0 %v229
  %302 = vmatpush.bf16.msra.mxu0 %v225
  %303 = vmatpush.bf16.msra.mxu0 %v221
  %304 = vmatpush.bf16.msra.mxu0 %v217
  %305 = vmatpush.bf16.msra.mxu0 %v213
  %306 = vmatpush.bf16.msra.mxu0 %v209
  %307 = vmatmul.bf16.gmra.mxu0 %v109
  %v308 = vpop.f32.mrf.mxu0
  %v309 = vadd.f32 0.0, %v308
  %v310 = vpop.f32.mrf.mxu0
  %v311 = vadd.f32 0.0, %v310
  %312 = vdwg.mxu0
  %313 = vmatpush.bf16.msra.mxu0 %v238
  %314 = vmatpush.bf16.msra.mxu0 %v234
  %315 = vmatpush.bf16.msra.mxu0 %v230
  %316 = vmatpush.bf16.msra.mxu0 %v226
  %317 = vmatpush.bf16.msra.mxu0 %v222
  %318 = vmatpush.bf16.msra.mxu0 %v218
  %319 = vmatpush.bf16.msra.mxu0 %v214
  %320 = vmatpush.bf16.msra.mxu0 %v210
  %321 = vmatmul.bf16.gmra.mxu0 %v109
  %v322 = vpop.f32.mrf.mxu0
  %v323 = vadd.f32 0.0, %v322
  %v324 = vpop.f32.mrf.mxu0
  %v325 = vadd.f32 0.0, %v324
  %326 = vdwg.mxu0
  %v327 = vld [vmem:[%s58] sm:$0xf]
  %v328 = vld [vmem:[%s58 + $0x4] sm:$0xf]
  %v331 = vunpack.c.l.b16 %v327
  %v332 = vunpack.c.l.b16 %v328
  %v333 = vpack.c.b16 %v332, %v331
  %335 = vmatpush.bf16.msra.mxu0 %v235
  %336 = vmatpush.bf16.msra.mxu0 %v231
  %337 = vmatpush.bf16.msra.mxu0 %v227
  %338 = vmatpush.bf16.msra.mxu0 %v223
  %339 = vmatpush.bf16.msra.mxu0 %v219
  %340 = vmatpush.bf16.msra.mxu0 %v215
  %341 = vmatpush.bf16.msra.mxu0 %v211
  %342 = vmatpush.bf16.msra.mxu0 %v207
  %343 = vmatmul.bf16.gmra.mxu0 %v333
  %v344 = vpop.f32.mrf.mxu0
  %v345 = vadd.f32 0.0, %v344
  %v346 = vpop.f32.mrf.mxu0
  %v347 = vadd.f32 0.0, %v346
  %348 = vdwg.mxu0
  %349 = vmatpush.bf16.msra.mxu0 %v236
  %350 = vmatpush.bf16.msra.mxu0 %v232
  %351 = vmatpush.bf16.msra.mxu0 %v228
  %352 = vmatpush.bf16.msra.mxu0 %v224
  %353 = vmatpush.bf16.msra.mxu0 %v220
  %354 = vmatpush.bf16.msra.mxu0 %v216
  %355 = vmatpush.bf16.msra.mxu0 %v212
  %356 = vmatpush.bf16.msra.mxu0 %v208
  %357 = vmatmul.bf16.gmra.mxu0 %v333
  %v358 = vpop.f32.mrf.mxu0
  %v359 = vadd.f32 0.0, %v358
  %v360 = vpop.f32.mrf.mxu0
  %v361 = vadd.f32 0.0, %v360
  %362 = vdwg.mxu0
  %363 = vmatpush.bf16.msra.mxu0 %v237
  %364 = vmatpush.bf16.msra.mxu0 %v233
  %365 = vmatpush.bf16.msra.mxu0 %v229
  %366 = vmatpush.bf16.msra.mxu0 %v225
  %367 = vmatpush.bf16.msra.mxu0 %v221
  %368 = vmatpush.bf16.msra.mxu0 %v217
  %369 = vmatpush.bf16.msra.mxu0 %v213
  %370 = vmatpush.bf16.msra.mxu0 %v209
  %371 = vmatmul.bf16.gmra.mxu0 %v333
  %v372 = vpop.f32.mrf.mxu0
  %v373 = vadd.f32 0.0, %v372
  %v374 = vpop.f32.mrf.mxu0
  %v375 = vadd.f32 0.0, %v374
  %376 = vdwg.mxu0
  %377 = vmatpush.bf16.msra.mxu0 %v238
  %378 = vmatpush.bf16.msra.mxu0 %v234
  %379 = vmatpush.bf16.msra.mxu0 %v230
  %380 = vmatpush.bf16.msra.mxu0 %v226
  %381 = vmatpush.bf16.msra.mxu0 %v222
  %382 = vmatpush.bf16.msra.mxu0 %v218
  %383 = vmatpush.bf16.msra.mxu0 %v214
  %384 = vmatpush.bf16.msra.mxu0 %v210
  %385 = vmatmul.bf16.gmra.mxu0 %v333
  %v386 = vpop.f32.mrf.mxu0
  %v387 = vadd.f32 0.0, %v386
  %v388 = vpop.f32.mrf.mxu0
  %v389 = vadd.f32 0.0, %v388
  %390 = vdwg.mxu0
  %v391 = vmul.f32 %v281, %v281
  %v392 = vmul.f32 %v295, %v295
  %v393 = vmul.f32 %v283, %v283
  %v394 = vmul.f32 %v297, %v297
  %v395 = vmul.f32 %v309, %v309
  %v396 = vmul.f32 %v323, %v323
  %v397 = vmul.f32 %v311, %v311
  %v398 = vmul.f32 %v325, %v325
  %v399 = vadd.f32 %v391, %v395
  %v400 = vadd.f32 %v392, %v396
  %v401 = vadd.f32 %v393, %v397
  %v402 = vadd.f32 %v394, %v398
  %v403 = vmul.f32 %v345, %v345
  %v404 = vmul.f32 %v359, %v359
  %v405 = vmul.f32 %v347, %v347
  %v406 = vmul.f32 %v361, %v361
  %v407 = vmul.f32 %v373, %v373
  %v408 = vmul.f32 %v387, %v387
  %v409 = vmul.f32 %v375, %v375
  %v410 = vmul.f32 %v389, %v389
  %v411 = vadd.f32 %v403, %v407
  %v412 = vadd.f32 %v404, %v408
  %v413 = vadd.f32 %v405, %v409
  %v414 = vadd.f32 %v406, %v410
  %v415 = vadd.f32 %v399, %v411
  %v416 = vadd.f32 %v400, %v412
  %v417 = vadd.f32 %v401, %v413
  %v418 = vadd.f32 %v402, %v414
  %v419 = vmul.f32 %v399, %v411
  %v420 = vmul.f32 %v400, %v412
  %v421 = vmul.f32 %v401, %v413
  %v422 = vmul.f32 %v402, %v414
  %v423 = vrsqrt.pop %v419
  %v424 = vmul.f32 %v423, %v419
  %v425 = vmul.f32 %v424, %v423
  %v426 = vmul.f32 0.5, %v425
  %v427 = vsub.f32 1.5, %v426
  %v428 = vmul.f32 %v423, %v427
  %v429 = vmul.f32 %v419, %v428
  %vm430 = vcmp.eq.f32.partialorder %v419, inf
  %v431 = vsel %vm430, %v419, %v429
  %vm432 = vcmp.eq.f32.partialorder %v419, 0.0
  %v433 = vand.u32 %v419, 2147483648
  %v434 = vsel %vm432, %v433, %v431
  %v435 = vrsqrt.pop %v420
  %v436 = vmul.f32 %v435, %v420
  %v437 = vmul.f32 %v436, %v435
  %v438 = vmul.f32 0.5, %v437
  %v439 = vsub.f32 1.5, %v438
  %v440 = vmul.f32 %v435, %v439
  %v441 = vmul.f32 %v420, %v440
  %vm442 = vcmp.eq.f32.partialorder %v420, inf
  %v443 = vsel %vm442, %v420, %v441
  %vm444 = vcmp.eq.f32.partialorder %v420, 0.0
  %v445 = vand.u32 %v420, 2147483648
  %v446 = vsel %vm444, %v445, %v443
  %v447 = vrsqrt.pop %v421
  %v448 = vmul.f32 %v447, %v421
  %v449 = vmul.f32 %v448, %v447
  %v450 = vmul.f32 0.5, %v449
  %v451 = vsub.f32 1.5, %v450
  %v452 = vmul.f32 %v447, %v451
  %v453 = vmul.f32 %v421, %v452
  %vm454 = vcmp.eq.f32.partialorder %v421, inf
  %v455 = vsel %vm454, %v421, %v453
  %vm456 = vcmp.eq.f32.partialorder %v421, 0.0
  %v457 = vand.u32 %v421, 2147483648
  %v458 = vsel %vm456, %v457, %v455
  %v459 = vrsqrt.pop %v422
  %v460 = vmul.f32 %v459, %v422
  %v461 = vmul.f32 %v460, %v459
  %v462 = vmul.f32 0.5, %v461
  %v463 = vsub.f32 1.5, %v462
  %v464 = vmul.f32 %v459, %v463
  %v465 = vmul.f32 %v422, %v464
  %vm466 = vcmp.eq.f32.partialorder %v422, inf
  %v467 = vsel %vm466, %v422, %v465
  %vm468 = vcmp.eq.f32.partialorder %v422, 0.0
  %v469 = vand.u32 %v422, 2147483648
  %v470 = vsel %vm468, %v469, %v467
  %v471 = vmul.f32 %v434, 2.0
  %v472 = vmul.f32 %v446, 2.0
  %v473 = vmul.f32 %v458, 2.0
  %v474 = vmul.f32 %v470, 2.0
  %v475 = vsub.f32 %v415, %v471
  %v476 = vsub.f32 %v416, %v472
  %v477 = vsub.f32 %v417, %v473
  %v478 = vsub.f32 %v418, %v474
  %v479 = vadd.f32 %v399, 1e-14
  %v480 = vadd.f32 %v400, 1e-14
  %v481 = vadd.f32 %v401, 1e-14
  %v482 = vadd.f32 %v402, 1e-14
  %v483 = vlog2.pop %v479
  %v484 = vmul.f32 %v483, 0.6931472
  %v485 = vlog2.pop %v480
  %v486 = vmul.f32 %v485, 0.6931472
  %v487 = vlog2.pop %v481
  %v488 = vmul.f32 %v487, 0.6931472
  %v489 = vlog2.pop %v482
  %v490 = vmul.f32 %v489, 0.6931472
  %v491 = vadd.f32 %v411, 1e-14
  %v492 = vadd.f32 %v412, 1e-14
  %v493 = vadd.f32 %v413, 1e-14
  %v494 = vadd.f32 %v414, 1e-14
  %v495 = vlog2.pop %v491
  %v496 = vmul.f32 %v495, 0.6931472
  %v497 = vlog2.pop %v492
  %v498 = vmul.f32 %v497, 0.6931472
  %v499 = vlog2.pop %v493
  %v500 = vmul.f32 %v499, 0.6931472
  %v501 = vlog2.pop %v494
  %v502 = vmul.f32 %v501, 0.6931472
  %v503 = vsub.f32 %v484, %v496
  %v504 = vsub.f32 %v486, %v498
  %v505 = vsub.f32 %v488, %v500
  %v506 = vsub.f32 %v490, %v502
  %v507 = vand.u32 2147483647, %v503
  %v508 = vand.u32 2147483647, %v504
  %v509 = vand.u32 2147483647, %v505
  %v510 = vand.u32 2147483647, %v506
  %v511 = vld [vmem:[%s3] sm:$0xff]
  %v512 = vld [vmem:[%s3 + $0x8] sm:$0xff]
  %v513 = vadd.f32 %v475, %v477
  %v514 = vadd.f32 %v476, %v478
  %v515 = vadd.f32 %v511, %v513
  %v516 = vadd.f32 %v512, %v514
  %517 = vst [vmem:[%s3] sm:$0xff] %v515
  %518 = vst [vmem:[%s3 + $0x8] sm:$0xff] %v516
  %v519 = vld [vmem:[%s4] sm:$0xff]
  %v520 = vld [vmem:[%s4 + $0x8] sm:$0xff]
  %v521 = vadd.f32 %v399, %v401
  %v522 = vadd.f32 %v400, %v402
  %v523 = vadd.f32 %v519, %v521
  %v524 = vadd.f32 %v520, %v522
  %525 = vst [vmem:[%s4] sm:$0xff] %v523
  %526 = vst [vmem:[%s4 + $0x8] sm:$0xff] %v524
  %v527 = vld [vmem:[%s5] sm:$0xff]
  %v528 = vld [vmem:[%s5 + $0x8] sm:$0xff]
  %v529 = vadd.f32 %v507, %v509
  %v530 = vadd.f32 %v508, %v510
  %v531 = vadd.f32 %v527, %v529
  %v532 = vadd.f32 %v528, %v530
  %533 = vst [vmem:[%s5] sm:$0xff] %v531
  %534 = vst [vmem:[%s5 + $0x8] sm:$0xff] %v532
  // Predicated region
  $region18: #{spectral_distance.2} parent=0 // pred_check
    _
  $region19: #{spectral_distance.2} parent=0 // pred_check_branch
    %536 = sbr.rel (0) target = $region21
  $region20: #{spectral_distance.2} parent=0 // pred_region
    _
  $region21: #{spectral_distance.2} parent=0 // pred_fallthru
    _
  // Predicated region
  $region22: #{spectral_distance.2} parent=0 // pred_check
    _
  $region23: #{spectral_distance.2} parent=0 // pred_check_branch
    %538 = sbr.rel (0) target = $region25
  $region24: #{spectral_distance.2} parent=0 // pred_region
    _
  $region25: #{spectral_distance.2} parent=0 // pred_fallthru
    _
  // Predicated region
  $region26: #{spectral_distance.2} parent=0 // pred_check
    _
  $region27: #{spectral_distance.2} parent=0 // pred_check_branch
    %540 = sbr.rel (0) target = $region29
  $region28: #{spectral_distance.2} parent=0 // pred_region
    _
  $region29: #{spectral_distance.2} parent=0 // pred_fallthru
    _
  // Predicated region
  $region30: #{spectral_distance.2} parent=0 // pred_check
    _
  $region31: #{spectral_distance.2} parent=0 // pred_check_branch
    %542 = sbr.rel (0) target = $region33
  $region32: #{spectral_distance.2} parent=0 // pred_region
    _
  $region33: #{spectral_distance.2} parent=0 // pred_fallthru
    _
  // Predicated region
  $region34: #{spectral_distance.2} parent=0 // pred_check
    _
  $region35: #{spectral_distance.2} parent=0 // pred_check_branch
    %544 = sbr.rel (0) target = $region37
  $region36: #{spectral_distance.2} parent=0 // pred_region
    _
  $region37: #{spectral_distance.2} parent=0 // pred_fallthru
    _
  // Predicated region
  $region38: #{spectral_distance.2} parent=0 // pred_check
    _
  $region39: #{spectral_distance.2} parent=0 // pred_check_branch
    %546 = sbr.rel (0) target = $region41
  $region40: #{spectral_distance.2} parent=0 // pred_region
    _
  $region41: #{spectral_distance.2} parent=0 // pred_fallthru
    _

</llo_original>
